<compile_context>
chip_gen: v7x
topology: tpu7x:2x2x1
jax: 0.10.0
libtpu: 0.0.40
codegen_flags: <defaults>
</compile_context>

<pallas_src>
import functools

import jax
import jax.numpy as jnp
from jax.experimental import pallas as pl
from jax.experimental.pallas import tpu as pltpu

_LANE = 128          # lane width / MXU granularity
_SUBLANE = 8         # sublane granularity


def _round_up(n, m):
    return ((n + m - 1) // m) * m


def _pad2(a, rows, cols, dtype):
    r, c = a.shape
    return jnp.pad(a, ((0, rows - r), (0, cols - c))).astype(dtype)


def _metaclass_kernel(x_ref, w1_ref, b1_ref, w2_ref, b2_ref, wc_ref, bc_ref,
                      out_ref):
    """Fused encoder (Linear-ReLU-Linear) + classifier (Linear) forward.

    All matmul operands are bf16 (MXU native); accumulation is f32.
    """
    x = x_ref[...]                                             # bf16 [TM, Din]

    # encoder layer 1: Linear + ReLU (bias/ReLU on the f32 accumulator)
    h = jnp.dot(x, w1_ref[...], preferred_element_type=jnp.float32)
    h = jnp.maximum(h + b1_ref[...], 0.0)                      # f32 [TM, H]

    # encoder layer 2: Linear -> embedding
    emb = jnp.dot(h.astype(jnp.bfloat16), w2_ref[...],
                  preferred_element_type=jnp.float32)
    emb = emb + b2_ref[...]                                     # f32 [TM, E]
    # .squeeze() in the reference is a no-op for batch > 1; kept 2D here.

    # classifier: Linear
    out = jnp.dot(emb.astype(jnp.bfloat16), wc_ref[...],
                  preferred_element_type=jnp.float32)
    out = out + bc_ref[...]                                     # f32 [TM, C]

    out_ref[...] = out.astype(out_ref.dtype)


@functools.partial(jax.jit, static_argnames=("block_m",))
def metaclass_forward(x, w1, b1, w2, b2, wc, bc, *, block_m=128):
    """Pad to lane-dense shapes, tile the batch, run the fused kernel."""
    batch, in_dim = x.shape
    hidden = w1.shape[1]
    emb_dim = w2.shape[1]
    num_classes = wc.shape[1]

    # Lane-dense padding (zero padding is exact for matmul/ReLU/bias-add).
    din_p = _round_up(in_dim, _LANE)
    hid_p = _round_up(hidden, _LANE)
    emb_p = _round_up(emb_dim, _LANE)
    cls_p = _round_up(num_classes, _LANE)

    # Batch tile: sublane-aligned, capped at block_m (128 default fits every
    # MXU generation; raise to 256 on v6e/v7x for very large batches).
    tm = min(block_m, _round_up(batch, _SUBLANE))
    batch_p = _round_up(batch, tm)

    # bf16 operands halve HBM traffic and hit native MXU throughput.
    x_p = _pad2(x, batch_p, din_p, jnp.bfloat16)
    w1_p = _pad2(w1, din_p, hid_p, jnp.bfloat16)
    w2_p = _pad2(w2, hid_p, emb_p, jnp.bfloat16)
    wc_p = _pad2(wc, emb_p, cls_p, jnp.bfloat16)
    b1_p = _pad2(b1, 1, hid_p, jnp.float32)
    b2_p = _pad2(b2, 1, emb_p, jnp.float32)
    bc_p = _pad2(bc, 1, cls_p, jnp.float32)

    grid = (batch_p // tm,)

    # Weights / biases: constant block index -> stay VMEM-resident across the
    # batch grid.  x / out: tiled along batch -> double-buffered DMA pipeline.
    resident = lambda shape: pl.BlockSpec(shape, lambda i: (0, 0))

    out_p = pl.pallas_call(
        _metaclass_kernel,
        out_shape=jax.ShapeDtypeStruct((batch_p, cls_p), jnp.float32),
        grid_spec=pltpu.PrefetchScalarGridSpec(
            num_scalar_prefetch=0,
            grid=grid,
            in_specs=[
                pl.BlockSpec((tm, din_p), lambda i: (i, 0)),   # x tile
                resident((din_p, hid_p)),                      # w1
                resident((1, hid_p)),                          # b1
                resident((hid_p, emb_p)),                      # w2
                resident((1, emb_p)),                          # b2
                resident((emb_p, cls_p)),                      # wc
                resident((1, cls_p)),                          # bc
            ],
            out_specs=pl.BlockSpec((tm, cls_p), lambda i: (i, 0)),
        ),
        compiler_params=pltpu.CompilerParams(
            dimension_semantics=("parallel",),        # v7x: shard batch on 2 TCs
            vmem_limit_bytes=48 * 1024 * 1024,        # safe on v5e/v6e/v7x
        ),
    )(x_p, w1_p, b1_p, w2_p, b2_p, wc_p, bc_p)

    # Strip padding.  (PyTorch's .squeeze() would drop the batch dim when
    # batch == 1; we keep the 2D [batch, classes] output.)
    # TODO(synk): for hidden/emb >= ~8K, add a K-tiled "arbitrary" grid axis
    # with a VMEM f32 accumulator instead of fully-resident weights (v7x 64MiB).
    return out_p[:batch, :num_classes]


def _init_params(key, in_dim, hidden, emb_dim, num_classes):
    """Deterministic parameter init (synthetic weights, no checkpoint load)."""
    k1, k2, k3 = jax.random.split(key, 3)
    w1 = jax.random.normal(k1, (in_dim, hidden), jnp.float32) * 0.1
    b1 = jnp.zeros((1, hidden), jnp.float32)
    w2 = jax.random.normal(k2, (hidden, emb_dim), jnp.float32) * 0.1
    b2 = jnp.zeros((1, emb_dim), jnp.float32)
    wc = jax.random.normal(k3, (emb_dim, num_classes), jnp.float32) * 0.1
    bc = jnp.zeros((1, num_classes), jnp.float32)
    return w1, b1, w2, b2, wc, bc


def _reference_forward(x, w1, b1, w2, b2, wc, bc):
    """Pure-JAX reference with the same mixed precision as the kernel
    (bf16 operands, f32 accumulation)."""
    mm = lambda a, b: jnp.dot(a.astype(jnp.bfloat16), b.astype(jnp.bfloat16),
                              preferred_element_type=jnp.float32)
    h = jnp.maximum(mm(x, w1) + b1, 0.0)
    emb = jnp.squeeze(mm(h, w2) + b2)        # matches encoder(x).squeeze()
    return mm(emb, wc) + bc


if __name__ == "__main__":
    batch, in_dim, hidden, emb_dim, num_classes = 2, 16, 32, 32, 8
    # NOTE: at these toy shapes the kernel is pure overhead vs. plain XLA; the
    # tiling/bf16/lane-padding above pays off once batch and feature dims
    # reach >= 128.

    key = jax.random.PRNGKey(0)
    kx, kp = jax.random.split(key)
    x = jax.random.normal(kx, (batch, in_dim), jnp.float32)
    params = _init_params(kp, in_dim, hidden, emb_dim, num_classes)

    out = metaclass_forward(x, *params)
    out = jax.block_until_ready(out)

    ref = _reference_forward(x, *params)
    assert out.shape == (batch, num_classes), out.shape
    assert jnp.allclose(out, ref, atol=1e-4, rtol=1e-4), \
        float(jnp.max(jnp.abs(out - ref)))

    print("KERNEL_OK")
</pallas_src>

<mosaic_0001>
module attributes {stable_mosaic.version = 11 : i64} {
  func.func @_metaclass_kernel(%arg0: i32, %arg1: memref<8x128xbf16, #tpu.memory_space<vmem>>, %arg2: memref<128x128xbf16, #tpu.memory_space<vmem>>, %arg3: memref<1x128xf32, #tpu.memory_space<vmem>>, %arg4: memref<128x128xbf16, #tpu.memory_space<vmem>>, %arg5: memref<1x128xf32, #tpu.memory_space<vmem>>, %arg6: memref<128x128xbf16, #tpu.memory_space<vmem>>, %arg7: memref<1x128xf32, #tpu.memory_space<vmem>>, %arg8: memref<8x128xf32, #tpu.memory_space<vmem>>) attributes {dimension_semantics = [#tpu.dimension_semantics<parallel>], iteration_bounds = array<i64: 1>, scalar_prefetch = 0 : i64, scratch_operands = 0 : i64, tpu.core_type = #tpu.core_type<tc>, window_params = [{transform_indices = @transform_0, window_bounds = array<i64: 8, 128>}, {pipeline_mode = #tpu.pipeline_mode<synchronous>, transform_indices = @transform_1, window_bounds = array<i64: 128, 128>}, {pipeline_mode = #tpu.pipeline_mode<synchronous>, transform_indices = @transform_2, window_bounds = array<i64: 1, 128>}, {pipeline_mode = #tpu.pipeline_mode<synchronous>, transform_indices = @transform_3, window_bounds = array<i64: 128, 128>}, {pipeline_mode = #tpu.pipeline_mode<synchronous>, transform_indices = @transform_4, window_bounds = array<i64: 1, 128>}, {pipeline_mode = #tpu.pipeline_mode<synchronous>, transform_indices = @transform_5, window_bounds = array<i64: 128, 128>}, {pipeline_mode = #tpu.pipeline_mode<synchronous>, transform_indices = @transform_6, window_bounds = array<i64: 1, 128>}, {transform_indices = @transform_7, window_bounds = array<i64: 8, 128>}]} {
    %c0 = arith.constant 0 : index
    %c0_0 = arith.constant 0 : index
    %0 = vector.load %arg1[%c0, %c0_0] : memref<8x128xbf16, #tpu.memory_space<vmem>>, vector<8x128xbf16>
    %c0_1 = arith.constant 0 : index
    %c0_2 = arith.constant 0 : index
    %1 = vector.load %arg2[%c0_1, %c0_2] : memref<128x128xbf16, #tpu.memory_space<vmem>>, vector<128x128xbf16>
    %cst = arith.constant dense<0.000000e+00> : vector<8x128xf32>
    %2 = tpu.matmul %0, %1, %cst {dimension_numbers = #tpu.dot_dimension_numbers<[1], [0], [0], [1], [0, 0, 1, 1], [], []>} : vector<8x128xbf16>, vector<128x128xbf16>, vector<8x128xf32> -> vector<8x128xf32>
    %c0_3 = arith.constant 0 : index
    %c0_4 = arith.constant 0 : index
    %3 = vector.load %arg3[%c0_3, %c0_4] : memref<1x128xf32, #tpu.memory_space<vmem>>, vector<1x128xf32>
    %4 = vector.broadcast %3 : vector<1x128xf32> to vector<8x128xf32>
    %5 = arith.addf %2, %4 : vector<8x128xf32>
    %cst_5 = arith.constant 0.000000e+00 : f32
    %6 = vector.broadcast %cst_5 : f32 to vector<8x128xf32>
    %7 = arith.maximumf %5, %6 : vector<8x128xf32>
    %8 = arith.truncf %7 : vector<8x128xf32> to vector<8x128xbf16>
    %c0_6 = arith.constant 0 : index
    %c0_7 = arith.constant 0 : index
    %9 = vector.load %arg4[%c0_6, %c0_7] : memref<128x128xbf16, #tpu.memory_space<vmem>>, vector<128x128xbf16>
    %cst_8 = arith.constant dense<0.000000e+00> : vector<8x128xf32>
    %10 = tpu.matmul %8, %9, %cst_8 {dimension_numbers = #tpu.dot_dimension_numbers<[1], [0], [0], [1], [0, 0, 1, 1], [], []>} : vector<8x128xbf16>, vector<128x128xbf16>, vector<8x128xf32> -> vector<8x128xf32>
    %c0_9 = arith.constant 0 : index
    %c0_10 = arith.constant 0 : index
    %11 = vector.load %arg5[%c0_9, %c0_10] : memref<1x128xf32, #tpu.memory_space<vmem>>, vector<1x128xf32>
    %12 = vector.broadcast %11 : vector<1x128xf32> to vector<8x128xf32>
    %13 = arith.addf %10, %12 : vector<8x128xf32>
    %14 = arith.truncf %13 : vector<8x128xf32> to vector<8x128xbf16>
    %c0_11 = arith.constant 0 : index
    %c0_12 = arith.constant 0 : index
    %15 = vector.load %arg6[%c0_11, %c0_12] : memref<128x128xbf16, #tpu.memory_space<vmem>>, vector<128x128xbf16>
    %cst_13 = arith.constant dense<0.000000e+00> : vector<8x128xf32>
    %16 = tpu.matmul %14, %15, %cst_13 {dimension_numbers = #tpu.dot_dimension_numbers<[1], [0], [0], [1], [0, 0, 1, 1], [], []>} : vector<8x128xbf16>, vector<128x128xbf16>, vector<8x128xf32> -> vector<8x128xf32>
    %c0_14 = arith.constant 0 : index
    %c0_15 = arith.constant 0 : index
    %17 = vector.load %arg7[%c0_14, %c0_15] : memref<1x128xf32, #tpu.memory_space<vmem>>, vector<1x128xf32>
    %18 = vector.broadcast %17 : vector<1x128xf32> to vector<8x128xf32>
    %19 = arith.addf %16, %18 : vector<8x128xf32>
    %c0_16 = arith.constant 0 : index
    %c0_17 = arith.constant 0 : index
    %20 = vector.load %arg8[%c0_16, %c0_17] : memref<8x128xf32, #tpu.memory_space<vmem>>, vector<8x128xf32>
    tpu.vector_store %arg8[%c0_16, %c0_17], %19 {strides = array<i32>} : memref<8x128xf32, #tpu.memory_space<vmem>>, vector<8x128xf32>,
    return
  }
  func.func @transform_0(%arg0: i32) -> (i32, i32) {
    %c0_i32 = arith.constant 0 : i32
    %c0_i32_0 = arith.constant 0 : i32
    return %arg0, %c0_i32 : i32, i32
  }
  func.func @transform_1(%arg0: i32) -> (i32, i32) {
    %c0_i32 = arith.constant 0 : i32
    %c0_i32_0 = arith.constant 0 : i32
    %c0_i32_1 = arith.constant 0 : i32
    return %c0_i32, %c0_i32_0 : i32, i32
  }
  func.func @transform_2(%arg0: i32) -> (i32, i32) {
    %c0_i32 = arith.constant 0 : i32
    %c0_i32_0 = arith.constant 0 : i32
    %c0_i32_1 = arith.constant 0 : i32
    return %c0_i32, %c0_i32_0 : i32, i32
  }
  func.func @transform_3(%arg0: i32) -> (i32, i32) {
    %c0_i32 = arith.constant 0 : i32
    %c0_i32_0 = arith.constant 0 : i32
    %c0_i32_1 = arith.constant 0 : i32
    return %c0_i32, %c0_i32_0 : i32, i32
  }
  func.func @transform_4(%arg0: i32) -> (i32, i32) {
    %c0_i32 = arith.constant 0 : i32
    %c0_i32_0 = arith.constant 0 : i32
    %c0_i32_1 = arith.constant 0 : i32
    return %c0_i32, %c0_i32_0 : i32, i32
  }
  func.func @transform_5(%arg0: i32) -> (i32, i32) {
    %c0_i32 = arith.constant 0 : i32
    %c0_i32_0 = arith.constant 0 : i32
    %c0_i32_1 = arith.constant 0 : i32
    return %c0_i32, %c0_i32_0 : i32, i32
  }
  func.func @transform_6(%arg0: i32) -> (i32, i32) {
    %c0_i32 = arith.constant 0 : i32
    %c0_i32_0 = arith.constant 0 : i32
    %c0_i32_1 = arith.constant 0 : i32
    return %c0_i32, %c0_i32_0 : i32, i32
  }
  func.func @transform_7(%arg0: i32) -> (i32, i32) {
    %c0_i32 = arith.constant 0 : i32
    %c0_i32_0 = arith.constant 0 : i32
    return %arg0, %c0_i32 : i32, i32
  }
}

</mosaic_0001>

<llo_original>
// kernel: metaclass_forward.1
$region0: #{metaclass_forward.1}
  #allocation0 [shape = 'u32[]', space=smem, size = 0x4, offset = 0x4, fixed_abs, tag = 'smem constant byte address 0x4 - core index']
  #allocation1 [shape = 'u32[144,128]{1,0:T(1,128)}', space=vmem, size = 0x12000, scoped, tag = 'internal scratch']
  %s0 = inlined_call_operand.vmem [shape: bf16[8,128], index: 0, kind: input, shape index: {}]
  %s1 = inlined_call_operand.vmem [shape: bf16[128,128], index: 1, kind: input, shape index: {}]
  %s2 = inlined_call_operand.vmem [shape: f32[1,128], index: 2, kind: input, shape index: {}]
  %s3 = inlined_call_operand.vmem [shape: bf16[128,128], index: 3, kind: input, shape index: {}]
  %s4 = inlined_call_operand.vmem [shape: f32[1,128], index: 4, kind: input, shape index: {}]
  %s5 = inlined_call_operand.vmem [shape: bf16[128,128], index: 5, kind: input, shape index: {}]
  %s6 = inlined_call_operand.vmem [shape: f32[1,128], index: 6, kind: input, shape index: {}]
  %s7 = inlined_call_operand.vmem [shape: f32[8,128], index: 7, kind: output, shape index: {}]
  %s8 = sld [smem:[#allocation0]]
  $region38: #{metaclass_forward.1} parent=0
    _
  %s10 = ssub.s32 1, %s8
  %s11 = scalar_select 0, %s10, %s8
  // Predicated region
  $region2: #{metaclass_forward.1} parent=0 // pred_check
    _
  $region3: #{metaclass_forward.1} parent=0 // pred_check_branch
    %13 = sbr.rel (0) target = $region5
  $region4: #{metaclass_forward.1} parent=0 // pred_region
    _
  $region5: #{metaclass_forward.1} parent=0 // pred_fallthru
    _
  // Predicated region
  $region6: #{metaclass_forward.1} parent=0 // pred_check
    _
  $region7: #{metaclass_forward.1} parent=0 // pred_check_branch
    %15 = sbr.rel (0) target = $region9
  $region8: #{metaclass_forward.1} parent=0 // pred_region
    _
  $region9: #{metaclass_forward.1} parent=0 // pred_fallthru
    _
  // Predicated region
  $region10: #{metaclass_forward.1} parent=0 // pred_check
    _
  $region11: #{metaclass_forward.1} parent=0 // pred_check_branch
    %17 = sbr.rel (0) target = $region13
  $region12: #{metaclass_forward.1} parent=0 // pred_region
    _
  $region13: #{metaclass_forward.1} parent=0 // pred_fallthru
    _
  // Predicated region
  $region14: #{metaclass_forward.1} parent=0 // pred_check
    _
  $region15: #{metaclass_forward.1} parent=0 // pred_check_branch
    %19 = sbr.rel (0) target = $region17
  $region16: #{metaclass_forward.1} parent=0 // pred_region
    _
  $region17: #{metaclass_forward.1} parent=0 // pred_fallthru
    _
  // Predicated region
  $region18: #{metaclass_forward.1} parent=0 // pred_check
    _
  $region19: #{metaclass_forward.1} parent=0 // pred_check_branch
    %21 = sbr.rel (0) target = $region21
  $region20: #{metaclass_forward.1} parent=0 // pred_region
    _
  $region21: #{metaclass_forward.1} parent=0 // pred_fallthru
    _
  // Predicated region
  $region22: #{metaclass_forward.1} parent=0 // pred_check
    _
  $region23: #{metaclass_forward.1} parent=0 // pred_check_branch
    %23 = sbr.rel (0) target = $region25
  $region24: #{metaclass_forward.1} parent=0 // pred_region
    _
  $region25: #{metaclass_forward.1} parent=0 // pred_fallthru
    _
  // Predicated region
  $region26: #{metaclass_forward.1} parent=0 // pred_check
    _
  $region27: #{metaclass_forward.1} parent=0 // pred_check_branch
    %25 = sbr.rel (0) target = $region29
  $region28: #{metaclass_forward.1} parent=0 // pred_region
    _
  $region29: #{metaclass_forward.1} parent=0 // pred_fallthru
    _
  %v27 = vld [vmem:[%s0] sm:$0xf]
  %v28 = vld [vmem:[%s1] sm:$0xf]
  %v29 = vld [vmem:[%s1 + $0x4] sm:$0xf]
  %v30 = vld [vmem:[%s1 + $0x8] sm:$0xf]
  %v31 = vld [vmem:[%s1 + $0xc] sm:$0xf]
  %v32 = vld [vmem:[%s1 + $0x10] sm:$0xf]
  %v33 = vld [vmem:[%s1 + $0x14] sm:$0xf]
  %v34 = vld [vmem:[%s1 + $0x18] sm:$0xf]
  %v35 = vld [vmem:[%s1 + $0x1c] sm:$0xf]
  %v36 = vld [vmem:[%s1 + $0x20] sm:$0xf]
  %v37 = vld [vmem:[%s1 + $0x24] sm:$0xf]
  %v38 = vld [vmem:[%s1 + $0x28] sm:$0xf]
  %v39 = vld [vmem:[%s1 + $0x2c] sm:$0xf]
  %v40 = vld [vmem:[%s1 + $0x30] sm:$0xf]
  %v41 = vld [vmem:[%s1 + $0x34] sm:$0xf]
  %v42 = vld [vmem:[%s1 + $0x38] sm:$0xf]
  %v43 = vld [vmem:[%s1 + $0x3c] sm:$0xf]
  %v44 = vld [vmem:[%s2] sm:$0x1]
  %v46 = vlaneseq
  %v47 = vshrl.u32 %v46, 7
  %v48 = vsub.s32 0, %v47
  %v49 = vrot.slane %v44, %v48
  %v67 = vunpack.c.l.b16 %v28
  %v68 = vunpack.c.l.b16 %v29
  %v69 = vunpack.c.l.b16 %v30
  %v70 = vunpack.c.l.b16 %v31
  %v71 = vunpack.c.l.b16 %v32
  %v72 = vunpack.c.l.b16 %v33
  %v73 = vunpack.c.l.b16 %v34
  %v74 = vunpack.c.l.b16 %v35
  %v75 = vunpack.c.l.b16 %v36
  %v76 = vunpack.c.l.b16 %v37
  %v77 = vunpack.c.l.b16 %v38
  %v78 = vunpack.c.l.b16 %v39
  %v79 = vunpack.c.l.b16 %v40
  %v80 = vunpack.c.l.b16 %v41
  %v81 = vunpack.c.l.b16 %v42
  %v82 = vunpack.c.l.b16 %v43
  %v83 = vpack.c.b16 %v68, %v67
  %v84 = vpack.c.b16 %v70, %v69
  %v85 = vpack.c.b16 %v72, %v71
  %v86 = vpack.c.b16 %v74, %v73
  %v87 = vpack.c.b16 %v76, %v75
  %v88 = vpack.c.b16 %v78, %v77
  %v89 = vpack.c.b16 %v80, %v79
  %v90 = vpack.c.b16 %v82, %v81
  %99 = vmatprep.subr.bf16.mxu0 0
  %100 = vmatpush1.bf16.msra.mxu0 %v83
  %101 = vmatprep.subr.bf16.mxu0 0
  %102 = vmatpush1.bf16.msra.mxu0 %v84
  %103 = vmatprep.subr.bf16.mxu0 0
  %104 = vmatpush1.bf16.msra.mxu0 %v85
  %105 = vmatprep.subr.bf16.mxu0 0
  %106 = vmatpush1.bf16.msra.mxu0 %v86
  %107 = vmatprep.subr.bf16.mxu0 0
  %108 = vmatpush1.bf16.msra.mxu0 %v87
  %109 = vmatprep.subr.bf16.mxu0 0
  %110 = vmatpush1.bf16.msra.mxu0 %v88
  %111 = vmatprep.subr.bf16.mxu0 0
  %112 = vmatpush1.bf16.msra.mxu0 %v89
  %113 = vmatprep.subr.bf16.mxu0 0
  %114 = vmatpush1.bf16.msra.mxu0 %v90
  %115 = vmatprep.subr.bf16.mxu0 0
  %116 = vmatpush1.bf16.msra.mxu0 0
  %117 = vmatprep.subr.bf16.mxu0 0
  %118 = vmatpush1.bf16.msra.mxu0 0
  %119 = vmatprep.subr.bf16.mxu0 0
  %120 = vmatpush1.bf16.msra.mxu0 0
  %121 = vmatprep.subr.bf16.mxu0 0
  %122 = vmatpush1.bf16.msra.mxu0 0
  %123 = vmatprep.subr.bf16.mxu0 0
  %124 = vmatpush1.bf16.msra.mxu0 0
  %125 = vmatprep.subr.bf16.mxu0 0
  %126 = vmatpush1.bf16.msra.mxu0 0
  %127 = vmatprep.subr.bf16.mxu0 0
  %128 = vmatpush1.bf16.msra.mxu0 0
  %129 = vmatprep.subr.bf16.mxu0 0
  %130 = vmatpush1.bf16.msra.mxu0 0
  %131 = vmatprep.mubr.bf16.mxu0 0
  %132 = vmatmul.mubr.bf16.gmra.mrb[0].mxu0 %v27
  %v133 = vpop.f32.mrb[0].mxu0
  %v134 = vadd.f32 %v49, %v133
  %v135 = vpop.f32.mrb[0].mxu0
  %v136 = vpop.f32.mrb[0].mxu0
  %v137 = vpop.f32.mrb[0].mxu0
  %138 = vdwg.mxu0
  %v139 = vmax.f32 %v134, 0.0
  %v140 = vpack.c.bf16 %v139, %v139
  %v141 = vld [vmem:[%s3] sm:$0xf]
  %v142 = vld [vmem:[%s3 + $0x4] sm:$0xf]
  %v143 = vld [vmem:[%s3 + $0x8] sm:$0xf]
  %v144 = vld [vmem:[%s3 + $0xc] sm:$0xf]
  %v145 = vld [vmem:[%s3 + $0x10] sm:$0xf]
  %v146 = vld [vmem:[%s3 + $0x14] sm:$0xf]
  %v147 = vld [vmem:[%s3 + $0x18] sm:$0xf]
  %v148 = vld [vmem:[%s3 + $0x1c] sm:$0xf]
  %v149 = vld [vmem:[%s3 + $0x20] sm:$0xf]
  %v150 = vld [vmem:[%s3 + $0x24] sm:$0xf]
  %v151 = vld [vmem:[%s3 + $0x28] sm:$0xf]
  %v152 = vld [vmem:[%s3 + $0x2c] sm:$0xf]
  %v153 = vld [vmem:[%s3 + $0x30] sm:$0xf]
  %v154 = vld [vmem:[%s3 + $0x34] sm:$0xf]
  %v155 = vld [vmem:[%s3 + $0x38] sm:$0xf]
  %v156 = vld [vmem:[%s3 + $0x3c] sm:$0xf]
  %v157 = vld [vmem:[%s4] sm:$0x1]
  %v159 = vlaneseq
  %v160 = vshrl.u32 %v159, 7
  %v161 = vsub.s32 0, %v160
  %v162 = vrot.slane %v157, %v161
  %v180 = vunpack.c.l.b16 %v141
  %v181 = vunpack.c.l.b16 %v142
  %v182 = vunpack.c.l.b16 %v143
  %v183 = vunpack.c.l.b16 %v144
  %v184 = vunpack.c.l.b16 %v145
  %v185 = vunpack.c.l.b16 %v146
  %v186 = vunpack.c.l.b16 %v147
  %v187 = vunpack.c.l.b16 %v148
  %v188 = vunpack.c.l.b16 %v149
  %v189 = vunpack.c.l.b16 %v150
  %v190 = vunpack.c.l.b16 %v151
  %v191 = vunpack.c.l.b16 %v152
  %v192 = vunpack.c.l.b16 %v153
  %v193 = vunpack.c.l.b16 %v154
  %v194 = vunpack.c.l.b16 %v155
  %v195 = vunpack.c.l.b16 %v156
  %v196 = vpack.c.b16 %v181, %v180
  %v197 = vpack.c.b16 %v183, %v182
  %v198 = vpack.c.b16 %v185, %v184
  %v199 = vpack.c.b16 %v187, %v186
  %v200 = vpack.c.b16 %v189, %v188
  %v201 = vpack.c.b16 %v191, %v190
  %v202 = vpack.c.b16 %v193, %v192
  %v203 = vpack.c.b16 %v195, %v194
  %212 = vmatprep.subr.bf16.mxu0 0
  %213 = vmatpush1.bf16.msra.mxu0 %v196
  %214 = vmatprep.subr.bf16.mxu0 0
  %215 = vmatpush1.bf16.msra.mxu0 %v197
  %216 = vmatprep.subr.bf16.mxu0 0
  %217 = vmatpush1.bf16.msra.mxu0 %v198
  %218 = vmatprep.subr.bf16.mxu0 0
  %219 = vmatpush1.bf16.msra.mxu0 %v199
  %220 = vmatprep.subr.bf16.mxu0 0
  %221 = vmatpush1.bf16.msra.mxu0 %v200
  %222 = vmatprep.subr.bf16.mxu0 0
  %223 = vmatpush1.bf16.msra.mxu0 %v201
  %224 = vmatprep.subr.bf16.mxu0 0
  %225 = vmatpush1.bf16.msra.mxu0 %v202
  %226 = vmatprep.subr.bf16.mxu0 0
  %227 = vmatpush1.bf16.msra.mxu0 %v203
  %228 = vmatprep.subr.bf16.mxu0 0
  %229 = vmatpush1.bf16.msra.mxu0 0
  %230 = vmatprep.subr.bf16.mxu0 0
  %231 = vmatpush1.bf16.msra.mxu0 0
  %232 = vmatprep.subr.bf16.mxu0 0
  %233 = vmatpush1.bf16.msra.mxu0 0
  %234 = vmatprep.subr.bf16.mxu0 0
  %235 = vmatpush1.bf16.msra.mxu0 0
  %236 = vmatprep.subr.bf16.mxu0 0
  %237 = vmatpush1.bf16.msra.mxu0 0
  %238 = vmatprep.subr.bf16.mxu0 0
  %239 = vmatpush1.bf16.msra.mxu0 0
  %240 = vmatprep.subr.bf16.mxu0 0
  %241 = vmatpush1.bf16.msra.mxu0 0
  %242 = vmatprep.subr.bf16.mxu0 0
  %243 = vmatpush1.bf16.msra.mxu0 0
  %244 = vmatprep.mubr.bf16.mxu0 0
  %245 = vmatmul.mubr.bf16.gmra.mrb[0].mxu0 %v140
  %v246 = vpop.f32.mrb[0].mxu0
  %v247 = vadd.f32 %v162, %v246
  %v248 = vpop.f32.mrb[0].mxu0
  %v249 = vpop.f32.mrb[0].mxu0
  %v250 = vpop.f32.mrb[0].mxu0
  %251 = vdwg.mxu0
  %v252 = vpack.c.bf16 %v247, %v247
  %v253 = vld [vmem:[%s5] sm:$0xf]
  %v254 = vld [vmem:[%s5 + $0x4] sm:$0xf]
  %v255 = vld [vmem:[%s5 + $0x8] sm:$0xf]
  %v256 = vld [vmem:[%s5 + $0xc] sm:$0xf]
  %v257 = vld [vmem:[%s5 + $0x10] sm:$0xf]
  %v258 = vld [vmem:[%s5 + $0x14] sm:$0xf]
  %v259 = vld [vmem:[%s5 + $0x18] sm:$0xf]
  %v260 = vld [vmem:[%s5 + $0x1c] sm:$0xf]
  %v261 = vld [vmem:[%s5 + $0x20] sm:$0xf]
  %v262 = vld [vmem:[%s5 + $0x24] sm:$0xf]
  %v263 = vld [vmem:[%s5 + $0x28] sm:$0xf]
  %v264 = vld [vmem:[%s5 + $0x2c] sm:$0xf]
  %v265 = vld [vmem:[%s5 + $0x30] sm:$0xf]
  %v266 = vld [vmem:[%s5 + $0x34] sm:$0xf]
  %v267 = vld [vmem:[%s5 + $0x38] sm:$0xf]
  %v268 = vld [vmem:[%s5 + $0x3c] sm:$0xf]
  %v269 = vld [vmem:[%s6] sm:$0x1]
  %v271 = vlaneseq
  %v272 = vshrl.u32 %v271, 7
  %v273 = vsub.s32 0, %v272
  %v274 = vrot.slane %v269, %v273
  %v292 = vunpack.c.l.b16 %v253
  %v293 = vunpack.c.l.b16 %v254
  %v294 = vunpack.c.l.b16 %v255
  %v295 = vunpack.c.l.b16 %v256
  %v296 = vunpack.c.l.b16 %v257
  %v297 = vunpack.c.l.b16 %v258
  %v298 = vunpack.c.l.b16 %v259
  %v299 = vunpack.c.l.b16 %v260
  %v300 = vunpack.c.l.b16 %v261
  %v301 = vunpack.c.l.b16 %v262
  %v302 = vunpack.c.l.b16 %v263
  %v303 = vunpack.c.l.b16 %v264
  %v304 = vunpack.c.l.b16 %v265
  %v305 = vunpack.c.l.b16 %v266
  %v306 = vunpack.c.l.b16 %v267
  %v307 = vunpack.c.l.b16 %v268
  %v308 = vpack.c.b16 %v293, %v292
  %v309 = vpack.c.b16 %v295, %v294
  %v310 = vpack.c.b16 %v297, %v296
  %v311 = vpack.c.b16 %v299, %v298
  %v312 = vpack.c.b16 %v301, %v300
  %v313 = vpack.c.b16 %v303, %v302
  %v314 = vpack.c.b16 %v305, %v304
  %v315 = vpack.c.b16 %v307, %v306
  %324 = vmatprep.subr.bf16.mxu0 0
  %325 = vmatpush1.bf16.msra.mxu0 %v308
  %326 = vmatprep.subr.bf16.mxu0 0
  %327 = vmatpush1.bf16.msra.mxu0 %v309
  %328 = vmatprep.subr.bf16.mxu0 0
  %329 = vmatpush1.bf16.msra.mxu0 %v310
  %330 = vmatprep.subr.bf16.mxu0 0
  %331 = vmatpush1.bf16.msra.mxu0 %v311
  %332 = vmatprep.subr.bf16.mxu0 0
  %333 = vmatpush1.bf16.msra.mxu0 %v312
  %334 = vmatprep.subr.bf16.mxu0 0
  %335 = vmatpush1.bf16.msra.mxu0 %v313
  %336 = vmatprep.subr.bf16.mxu0 0
  %337 = vmatpush1.bf16.msra.mxu0 %v314
  %338 = vmatprep.subr.bf16.mxu0 0
  %339 = vmatpush1.bf16.msra.mxu0 %v315
  %340 = vmatprep.subr.bf16.mxu0 0
  %341 = vmatpush1.bf16.msra.mxu0 0
  %342 = vmatprep.subr.bf16.mxu0 0
  %343 = vmatpush1.bf16.msra.mxu0 0
  %344 = vmatprep.subr.bf16.mxu0 0
  %345 = vmatpush1.bf16.msra.mxu0 0
  %346 = vmatprep.subr.bf16.mxu0 0
  %347 = vmatpush1.bf16.msra.mxu0 0
  %348 = vmatprep.subr.bf16.mxu0 0
  %349 = vmatpush1.bf16.msra.mxu0 0
  %350 = vmatprep.subr.bf16.mxu0 0
  %351 = vmatpush1.bf16.msra.mxu0 0
  %352 = vmatprep.subr.bf16.mxu0 0
  %353 = vmatpush1.bf16.msra.mxu0 0
  %354 = vmatprep.subr.bf16.mxu0 0
  %355 = vmatpush1.bf16.msra.mxu0 0
  %356 = vmatprep.mubr.bf16.mxu0 0
  %357 = vmatmul.mubr.bf16.gmra.mrb[0].mxu0 %v252
  %v358 = vpop.f32.mrb[0].mxu0
  %v359 = vadd.f32 %v274, %v358
  %v360 = vpop.f32.mrb[0].mxu0
  %v361 = vpop.f32.mrb[0].mxu0
  %v362 = vpop.f32.mrb[0].mxu0
  %363 = vdwg.mxu0
  %364 = vst [vmem:[%s7] sm:$0xff] %v359
  // Predicated region
  $region30: #{metaclass_forward.1} parent=0 // pred_check
    _
  $region31: #{metaclass_forward.1} parent=0 // pred_check_branch
    %366 = sbr.rel (0) target = $region33
  $region32: #{metaclass_forward.1} parent=0 // pred_region
    _
  $region33: #{metaclass_forward.1} parent=0 // pred_fallthru
    _
  // Predicated region
  $region34: #{metaclass_forward.1} parent=0 // pred_check
    _
  $region35: #{metaclass_forward.1} parent=0 // pred_check_branch
    %368 = sbr.rel (0) target = $region37
  $region36: #{metaclass_forward.1} parent=0 // pred_region
    _
  $region37: #{metaclass_forward.1} parent=0 // pred_fallthru
    _

</llo_original>
